<compile_context>
chip_gen: v5e
topology: v5e:2x2
jax: 0.10.0
libtpu: 0.0.40
codegen_flags: <defaults>
</compile_context>

<pallas_src>
import jax
import jax.numpy as jnp
from jax import lax
from jax.experimental import pallas as pl
from jax.experimental.pallas import tpu as pltpu

ALPHA = 1.0
GAMMA = 2.0
LANE = 128
SUBLANE = 8
MAX_ROW_TILE = 8192            # (8192, 128) f32 = 4 MiB per input per grid step
SUB_ROWS = 512                 # inner-loop sub-slice: bounds elementwise temporaries
DEFAULT_NUM_CORES = 2          # used when the TensorCore count cannot be detected
VMEM_LIMIT_BYTES = 32 * 1024 * 1024   # explicit scoped-VMEM budget (> v5e's 16 MiB default)

_NUM_TC_CACHE = []             # [int | None]
_CORE_SEM_CACHE = {}           # num_cores -> index of the working dimension_semantics


def _round_up(x, m):
    return ((x + m - 1) // m) * m


def _detect_num_tensorcores():
    """Best-effort TensorCores-per-device count; None if unknown."""
    if _NUM_TC_CACHE:
        return _NUM_TC_CACHE[0]
    n = None
    try:
        info = pltpu.get_tpu_info()
        for name in ("num_cores", "num_tensorcores", "tensorcore_count",
                     "cores_per_chip", "num_cores_per_chip"):
            v = getattr(info, name, None)
            if isinstance(v, int) and v >= 1:
                n = v
                break
    except Exception:
        n = None
    if n is None:
        try:
            v = getattr(jax.devices()[0], "num_cores", None)
            if isinstance(v, int) and v >= 1:
                n = v
        except Exception:
            pass
    _NUM_TC_CACHE.append(n)
    return n


def _make_bce_sum_kernel(row_tile, sub_rows, binary_targets):
    """Accumulate sum of s = t*log(x) + (1-t)*log(1-x) (== -BCE per element)
    into a per-core, vreg-shaped (1, 8, 128) accumulator that stays resident
    across the reduction (chunk) grid axis."""
    n_sub = row_tile // sub_rows

    def kernel(x_ref, t_ref, o_ref):
        @pl.when(pl.program_id(1) == 0)
        def _():
            o_ref[...] = jnp.zeros_like(o_ref)

        def accumulate(start_row, acc):
            x = x_ref[pl.ds(start_row, sub_rows), :].astype(jnp.float32)
            t = t_ref[pl.ds(start_row, sub_rows), :].astype(jnp.float32)
            # torch.binary_cross_entropy clamps each log term at -100.
            if binary_targets:
                # One EUP log per element (valid only for hard {0,1} targets).
                s = jnp.maximum(jnp.log(jnp.where(t > 0.5, x, 1.0 - x)), -100.0)
            else:
                log_x = jnp.maximum(jnp.log(x), -100.0)
                log_1mx = jnp.maximum(jnp.log(1.0 - x), -100.0)
                s = log_1mx + t * (log_x - log_1mx)   # == t*log_x + (1-t)*log_1mx
            # Sublane fold: (sub_rows, 128) -> (8, 128) using pure VPU adds; the
            # single cross-lane reduce happens once, in the wrapper epilogue.
            folded = s.reshape(sub_rows // SUBLANE, SUBLANE, LANE).sum(axis=0)
            return acc + folded

        acc0 = jnp.zeros((SUBLANE, LANE), jnp.float32)
        if n_sub == 1:
            acc = accumulate(0, acc0)
        else:
            acc = lax.fori_loop(
                0, n_sub,
                lambda j, a: accumulate(pl.multiple_of(j * sub_rows, sub_rows), a),
                acc0)
        o_ref[...] += acc[None]

    return kernel


def _dim_sem_candidates(num_cores, detected):
    if num_cores >= 2:
        cands = [("parallel", "arbitrary")]
        if detected is not None and int(detected) >= 2:
            # Multi-TensorCore chip (v7x / megacore): request an explicit core
            # split; fall back to "parallel" if this target rejects it.
            cands.insert(0, (pltpu.CORE_PARALLEL, pltpu.ARBITRARY))
        return cands
    return [("arbitrary", "arbitrary")]


def _call_with_core_fallback(call, num_cores, detected):
    cands = _dim_sem_candidates(num_cores, detected)
    start = _CORE_SEM_CACHE.get(num_cores, 0)
    err = None
    for idx in range(start, len(cands)):
        try:
            out = call(cands[idx])
            if len(cands) > 1 and num_cores not in _CORE_SEM_CACHE:
                out = jax.block_until_ready(out)  # surface failures only on the one-time probe
            _CORE_SEM_CACHE[num_cores] = idx
            return out
        except Exception as e:  # fall back to portable dimension semantics
            err = e
    raise err


def focal_loss(inputs, targets, alpha=ALPHA, gamma=GAMMA, binary_targets=False):
    """FocalLoss.forward for the default config (logits=False, reduce=True).

    inputs: probabilities in [0, 1]; targets: same shape (bf16/int8 targets are
    fine — the kernel upcasts in-register).  Returns a scalar f32.
    """
    # TODO(synk): only the default config is implemented; logits=True and
    # reduce=False module configurations are not covered by this kernel.
    assert inputs.shape == targets.shape
    total = inputs.size

    detected = _detect_num_tensorcores()
    num_cores = DEFAULT_NUM_CORES if detected is None else max(1, min(int(detected), 2))

    # Sublane granularity required by the narrowest streamed dtype
    # (f32 -> 8 rows, bf16 -> 16, int8/fp8 -> 32).
    gran = max(
        SUBLANE * max(1, 4 // jnp.dtype(inputs.dtype).itemsize),
        SUBLANE * max(1, 4 // jnp.dtype(targets.dtype).itemsize),
    )

    rows = pl.cdiv(total, LANE)
    per_core = pl.cdiv(rows, num_cores)
    if per_core >= MAX_ROW_TILE:
        row_tile = MAX_ROW_TILE
    elif per_core > SUB_ROWS:
        row_tile = _round_up(per_core, SUB_ROWS)
    else:
        row_tile = _round_up(per_core, gran)
    sub_rows = min(SUB_ROWS, row_tile)
    chunks = pl.cdiv(rows, num_cores * row_tile)
    rows_padded = num_cores * chunks * row_tile
    total_padded = rows_padded * LANE

    # Pad with (x=1, t=1): per-element BCE contribution is exactly 0 in both
    # code paths, so any input size gets the large tile (no tiny-tile cliff).
    x_flat = inputs.reshape(-1)
    t_flat = targets.reshape(-1)
    pad = total_padded - total
    if pad:
        x_flat = jnp.pad(x_flat, (0, pad), constant_values=1)
        t_flat = jnp.pad(t_flat, (0, pad), constant_values=1)
    x2d = x_flat.reshape(rows_padded, LANE)
    t2d = t_flat.reshape(rows_padded, LANE)

    kernel = _make_bce_sum_kernel(row_tile, sub_rows, binary_targets)
    in_map = lambda c, i: (c * chunks + i, 0)
    grid_spec = pltpu.PrefetchScalarGridSpec(
        num_scalar_prefetch=0,
        grid=(num_cores, chunks),          # reduction (chunk) axis last
        in_specs=[
            # NOTE: add pipeline_mode=pl.Buffered(3) here if xprof shows exposed
            # DMA at step boundaries on v7x.
            pl.BlockSpec((row_tile, LANE), in_map),
            pl.BlockSpec((row_tile, LANE), in_map),
        ],
        # Per-core accumulator stays resident across the reduction axis.
        out_specs=pl.BlockSpec((1, SUBLANE, LANE), lambda c, i: (c, 0, 0)),
    )
    out_shape = jax.ShapeDtypeStruct((num_cores, SUBLANE, LANE), jnp.float32)

    def call(dim_sems):
        return pl.pallas_call(
            kernel,
            out_shape=out_shape,
            grid_spec=grid_spec,
            compiler_params=pltpu.CompilerParams(
                dimension_semantics=dim_sems,
                vmem_limit_bytes=VMEM_LIMIT_BYTES,
            ),
        )(x2d, t2d)

    partials = _call_with_core_fallback(call, num_cores, detected)

    # Tiny scalar epilogue: one cross-lane reduce of num_cores*8*128 partials +
    # a handful of flops.  Partials hold sum(-BCE), so negate once here.
    mean_bce = -jnp.sum(partials) / jnp.float32(total)
    pt = jnp.exp(-mean_bce)
    if float(gamma) == 2.0:
        mod = jnp.square(1.0 - pt)        # avoid pow -> exp(g*log(.)) EUP ops
    else:
        mod = (1.0 - pt) ** gamma
    return (alpha * mod * mean_bce).astype(jnp.float32)


def _focal_loss_ref(inputs, targets, alpha=ALPHA, gamma=GAMMA):
    x = inputs.astype(jnp.float32)
    t = targets.astype(jnp.float32)
    log_x = jnp.maximum(jnp.log(x), -100.0)
    log_1mx = jnp.maximum(jnp.log(1.0 - x), -100.0)
    bce = jnp.mean(-(t * log_x + (1.0 - t) * log_1mx))
    pt = jnp.exp(-bce)
    return alpha * (1.0 - pt) ** gamma * bce


if __name__ == "__main__":
    key = jax.random.PRNGKey(0)
    k1, k2 = jax.random.split(key)
    B, C, H, W = 2, 4, 16, 16
    # inputs are probabilities (logits=False path); targets are hard {0,1}
    # labels streamed as bf16 (exact for binary labels, 2x fewer target bytes).
    inputs = jax.nn.sigmoid(jax.random.normal(k1, (B, C, H, W), dtype=jnp.float32))
    targets = jax.random.bernoulli(k2, 0.5, (B, C, H, W)).astype(jnp.bfloat16)

    ref = _focal_loss_ref(inputs, targets)

    loss = jax.block_until_ready(focal_loss(inputs, targets))            # general (soft-target) path
    loss_bin = jax.block_until_ready(
        focal_loss(inputs, targets, binary_targets=True))                # 1-log fast path

    assert jnp.allclose(loss, ref, rtol=1e-5, atol=1e-6), (loss, ref)
    assert jnp.allclose(loss_bin, ref, rtol=1e-5, atol=1e-6), (loss_bin, ref)
    print("KERNEL_OK")
</pallas_src>

<mosaic_0001>
module attributes {stable_mosaic.version = 11 : i64} {
  func.func @kernel(%arg0: i32, %arg1: i32, %arg2: memref<16x128xf32, #tpu.memory_space<vmem>>, %arg3: memref<16x128xbf16, #tpu.memory_space<vmem>>, %arg4: memref<1x8x128xf32, #tpu.memory_space<vmem>>) attributes {dimension_semantics = [#tpu.dimension_semantics<parallel>, #tpu.dimension_semantics<arbitrary>], iteration_bounds = array<i64: 2, 1>, scalar_prefetch = 0 : i64, scratch_operands = 0 : i64, tpu.core_type = #tpu.core_type<tc>, window_params = [{transform_indices = @transform_0, window_bounds = array<i64: 16, 128>}, {transform_indices = @transform_1, window_bounds = array<i64: 16, 128>}, {transform_indices = @transform_2, window_bounds = array<i64: 1, 8, 128>}]} {
    %c0_i32 = arith.constant 0 : i32
    %0 = arith.cmpi eq, %arg1, %c0_i32 : i32
    %1 = arith.extui %0 : i1 to i32
    %c0_i32_0 = arith.constant 0 : i32
    %2 = arith.cmpi ne, %1, %c0_i32_0 : i32
    scf.if %2 {
      %cst_14 = arith.constant 0.000000e+00 : f32
      %25 = vector.broadcast %cst_14 : f32 to vector<1x8x128xf32>
      %c0_15 = arith.constant 0 : index
      %c0_16 = arith.constant 0 : index
      %c0_17 = arith.constant 0 : index
      %26 = vector.load %arg4[%c0_15, %c0_16, %c0_17] : memref<1x8x128xf32, #tpu.memory_space<vmem>>, vector<1x8x128xf32>
      tpu.vector_store %arg4[%c0_15, %c0_16, %c0_17], %25 {strides = array<i32>} : memref<1x8x128xf32, #tpu.memory_space<vmem>>, vector<1x8x128xf32>,
    } else {
    }
    %cst = arith.constant 0.000000e+00 : f32
    %3 = vector.broadcast %cst : f32 to vector<8x128xf32>
    %c0 = arith.constant 0 : index
    %c0_1 = arith.constant 0 : index
    %4 = vector.load %arg2[%c0, %c0_1] : memref<16x128xf32, #tpu.memory_space<vmem>>, vector<16x128xf32>
    %c0_2 = arith.constant 0 : index
    %c0_3 = arith.constant 0 : index
    %5 = vector.load %arg3[%c0_2, %c0_3] : memref<16x128xbf16, #tpu.memory_space<vmem>>, vector<16x128xbf16>
    %6 = arith.extf %5 : vector<16x128xbf16> to vector<16x128xf32>
    %7 = math.log %4 : vector<16x128xf32>
    %cst_4 = arith.constant -1.000000e+02 : f32
    %8 = vector.broadcast %cst_4 : f32 to vector<16x128xf32>
    %9 = arith.maximumf %7, %8 : vector<16x128xf32>
    %cst_5 = arith.constant 1.000000e+00 : f32
    %10 = vector.broadcast %cst_5 : f32 to vector<16x128xf32>
    %11 = arith.subf %10, %4 : vector<16x128xf32>
    %12 = math.log %11 : vector<16x128xf32>
    %cst_6 = arith.constant -1.000000e+02 : f32
    %13 = vector.broadcast %cst_6 : f32 to vector<16x128xf32>
    %14 = arith.maximumf %12, %13 : vector<16x128xf32>
    %15 = arith.subf %9, %14 : vector<16x128xf32>
    %16 = arith.mulf %6, %15 : vector<16x128xf32>
    %17 = arith.addf %14, %16 : vector<16x128xf32>
    %18 = vector.shape_cast %17 : vector<16x128xf32> to vector<2x8x128xf32>
    %cst_7 = arith.constant dense<0.000000e+00> : vector<8x128xf32>
    %19 = vector.multi_reduction <add>, %18, %cst_7 [0] : vector<2x8x128xf32> to vector<8x128xf32>
    %20 = arith.addf %3, %19 : vector<8x128xf32>
    %c0_8 = arith.constant 0 : index
    %c0_9 = arith.constant 0 : index
    %c0_10 = arith.constant 0 : index
    %21 = vector.load %arg4[%c0_8, %c0_9, %c0_10] : memref<1x8x128xf32, #tpu.memory_space<vmem>>, vector<1x8x128xf32>
    %22 = vector.shape_cast %20 : vector<8x128xf32> to vector<1x8x128xf32>
    %23 = arith.addf %21, %22 : vector<1x8x128xf32>
    %c0_11 = arith.constant 0 : index
    %c0_12 = arith.constant 0 : index
    %c0_13 = arith.constant 0 : index
    %24 = vector.load %arg4[%c0_11, %c0_12, %c0_13] : memref<1x8x128xf32, #tpu.memory_space<vmem>>, vector<1x8x128xf32>
    tpu.vector_store %arg4[%c0_11, %c0_12, %c0_13], %23 {strides = array<i32>} : memref<1x8x128xf32, #tpu.memory_space<vmem>>, vector<1x8x128xf32>,
    return
  }
  func.func @transform_0(%arg0: i32, %arg1: i32) -> (i32, i32) {
    %c1_i32 = arith.constant 1 : i32
    %0 = arith.muli %arg0, %c1_i32 : i32
    %1 = arith.addi %0, %arg1 : i32
    %c0_i32 = arith.constant 0 : i32
    %c0_i32_0 = arith.constant 0 : i32
    return %1, %c0_i32 : i32, i32
  }
  func.func @transform_1(%arg0: i32, %arg1: i32) -> (i32, i32) {
    %c1_i32 = arith.constant 1 : i32
    %0 = arith.muli %arg0, %c1_i32 : i32
    %1 = arith.addi %0, %arg1 : i32
    %c0_i32 = arith.constant 0 : i32
    %c0_i32_0 = arith.constant 0 : i32
    return %1, %c0_i32 : i32, i32
  }
  func.func @transform_2(%arg0: i32, %arg1: i32) -> (i32, i32, i32) {
    %c0_i32 = arith.constant 0 : i32
    %c0_i32_0 = arith.constant 0 : i32
    %c0_i32_1 = arith.constant 0 : i32
    return %arg0, %c0_i32, %c0_i32_0 : i32, i32, i32
  }
}

</mosaic_0001>

<llo_original>
// kernel: tpu_custom_call.1
$region0: #{tpu_custom_call.1}
  #allocation0 [shape = 'u32[]', space=smem, size = 0x4, offset = 0x4, fixed_abs, tag = 'smem constant byte address 0x4 - core index']
  #allocation1 [shape = 'u32[72,128]{1,0:T(1,128)}', space=vmem, size = 0x9000, scoped, tag = 'internal scratch']
  %s0 = inlined_call_operand.hbm [shape: f32[32,128], index: 0, kind: input, shape index: {}]
  %s1 = inlined_call_operand.hbm [shape: bf16[32,128], index: 1, kind: input, shape index: {}]
  %s2 = inlined_call_operand.hbm [shape: f32[2,8,128], index: 2, kind: output, shape index: {}]
  %s3 = sld [smem:[#allocation0]]
  $region53: #{tpu_custom_call.1} parent=0
    _
  %s5 = ssub.s32 1, %s3
  %s6 = scalar_select 0, %s5, %s3
  $region1: #{tpu_custom_call.1} parent=0
    #allocation2 [shape = 'u8[16384]{0}', space=vmem, size = 0x4000, scoped, tag = 'input window, operand 0']
    #allocation3 [shape = 's32[2]{0}', space=sflag, size = 0x8, scoped, tag = 'scoped memory for tpu_custom_call.1']
    #allocation4 [shape = 's32[2]{0}', space=sflag, size = 0x8, scoped, tag = 'scoped memory for tpu_custom_call.1']
    #allocation5 [shape = 'u8[8192]{0}', space=vmem, size = 0x2000, scoped, tag = 'input window, operand 1']
    #allocation6 [shape = 's32[2]{0}', space=sflag, size = 0x8, scoped, tag = 'scoped memory for tpu_custom_call.1']
    #allocation7 [shape = 'u8[8192]{0}', space=vmem, size = 0x2000, scoped, tag = 'output window, operand 0']
    %7 = vsyncpa [#allocation3], 0
    %s8 = scalar_lea.sflag [#allocation3], 1
    %9 = vsyncpa %s8, 0
    %10 = vsyncpa [#allocation6], 0
    %s11 = scalar_lea.sflag [#allocation6], 1
    %12 = vsyncpa %s11, 0
    %13 = vsyncpa [#allocation4], 0
    %s14 = scalar_lea.sflag [#allocation4], 1
    %15 = vsyncpa %s14, 0
    loop: start=0, step=1, limit=4
    $region2: #{tpu_custom_call.1} parent=1 // loop_pre_header
      _
    $region3: #{tpu_custom_call.1} parent=1 // loop_header
      %s17 = sphi 0, %s21
      %p18 = scmp.ge.s32.totalorder %s17, 4
      %s24 = sphi 0, %s36
      %s25 = sphi 0, %s32
      %s26 = sphi 0, %s24
      %s27 = sphi 0, %s25
      %s28 = sphi 0, %s26
      %s29 = sphi 0, %s27
      %s41 = sphi 0, %s43
      %s44 = sphi 0, %s41
      %s45 = sphi 0, %s44
      %s61 = sphi 0, %s45
      %s69 = sphi 0, %s71
      %s72 = sphi 0, %s69
      %s73 = sphi 0, %s72
      %s89 = sphi 0, %s73
      %s95 = sphi 0, %s97
      %s98 = sphi 0, %s95
      %s99 = sphi 0, %s98
      %s115 = sphi 0, %s99
    $region4: #{tpu_custom_call.1} parent=1 // loop_header_branch
      %20 = sbr.rel (%p18) target = $region8
    $region5: #{tpu_custom_call.1} parent=1 // loop_body
      %s22 = ssub.s32 %s17, 1
      %s23 = ssub.s32 %s17, 2
      %s30 = sadd.s32 1, %s25
      %p31 = scmp.ge.s32.totalorder %s30, 1
      %s32 = scalar_select %p31, 0, %s30
      %s33 = sadd.s32 1, %s24
      %s34 = scalar_select %p31, %s33, %s24
      %p35 = scmp.ge.s32.totalorder %s34, 2
      %s36 = scalar_select %p35, 0, %s34
      %s37 = sadd.s32 %s24, %s25
      %s38 = sadd.s32 %s36, %s32
      %s39 = ssub.s32 %s37, %s38
      %p40 = scmp.eq.s32.totalorder %s39, 0
      %s42 = sadd.s32 %s41, 1
      %s43 = scalar_select %p40, %s41, %s42
      %p46 = pneg %p40
      %p47 = scmp.eq.s32.totalorder %s17, 1
      %p48 = por %p46, %p47
      %p49 = scmp.ne.s32.totalorder %s41, %s44
      %p50 = scmp.eq.s32.totalorder %s17, 0
      %p51 = por %p49, %p50
      %p52 = scmp.ne.s32.totalorder %s41, %s44
      %p53 = scmp.eq.s32.totalorder %s22, 1
      %p54 = por %p52, %p53
      %p55 = scmp.ne.s32.totalorder %s44, %s45
      %p56 = scmp.eq.s32.totalorder %s22, 0
      %p57 = por %p55, %p56
      %p58 = scmp.ne.s32.totalorder %s44, %s45
      %p59 = scmp.eq.s32.totalorder %s23, 1
      %p60 = por %p58, %p59
      %p62 = scmp.ne.s32.totalorder %s45, %s61
      %p63 = scmp.eq.s32.totalorder %s23, 0
      %p64 = por %p62, %p63
      %s65 = sadd.s32 %s24, %s25
      %s66 = sadd.s32 %s36, %s32
      %s67 = ssub.s32 %s65, %s66
      %p68 = scmp.eq.s32.totalorder %s67, 0
      %s70 = sadd.s32 %s69, 1
      %s71 = scalar_select %p68, %s69, %s70
      %p74 = pneg %p68
      %p75 = scmp.eq.s32.totalorder %s17, 1
      %p76 = por %p74, %p75
      %p77 = scmp.ne.s32.totalorder %s69, %s72
      %p78 = scmp.eq.s32.totalorder %s17, 0
      %p79 = por %p77, %p78
      %p80 = scmp.ne.s32.totalorder %s69, %s72
      %p81 = scmp.eq.s32.totalorder %s22, 1
      %p82 = por %p80, %p81
      %p83 = scmp.ne.s32.totalorder %s72, %s73
      %p84 = scmp.eq.s32.totalorder %s22, 0
      %p85 = por %p83, %p84
      %p86 = scmp.ne.s32.totalorder %s72, %s73
      %p87 = scmp.eq.s32.totalorder %s23, 1
      %p88 = por %p86, %p87
      %p90 = scmp.ne.s32.totalorder %s73, %s89
      %p91 = scmp.eq.s32.totalorder %s23, 0
      %p92 = por %p90, %p91
      %s93 = ssub.s32 %s24, %s36
      %p94 = scmp.eq.s32.totalorder %s93, 0
      %s96 = sadd.s32 %s95, 1
      %s97 = scalar_select %p94, %s95, %s96
      %p100 = pneg %p94
      %p101 = scmp.eq.s32.totalorder %s17, 1
      %p102 = por %p100, %p101
      %p103 = scmp.ne.s32.totalorder %s95, %s98
      %p104 = scmp.eq.s32.totalorder %s17, 0
      %p105 = por %p103, %p104
      %p106 = scmp.ne.s32.totalorder %s95, %s98
      %p107 = scmp.eq.s32.totalorder %s22, 1
      %p108 = por %p106, %p107
      %p109 = scmp.ne.s32.totalorder %s98, %s99
      %p110 = scmp.eq.s32.totalorder %s22, 0
      %p111 = por %p109, %p110
      %p112 = scmp.ne.s32.totalorder %s98, %s99
      %p113 = scmp.eq.s32.totalorder %s23, 1
      %p114 = por %p112, %p113
      %p116 = scmp.ne.s32.totalorder %s99, %s115
      %p117 = scmp.eq.s32.totalorder %s23, 0
      %p118 = por %p116, %p117
      %p119 = scmp.le.s32.totalorder 1, %s17
      %p120 = scmp.lt.s32.totalorder %s17, 3
      %p121 = pnand %p119, %p120
      %p122 = pneg %p121
      // Predicated region
      $region9: #{tpu_custom_call.1} parent=5 // pred_check
        _
      $region10: #{tpu_custom_call.1} parent=5 // pred_check_branch
        %124 = sbr.rel (%p121) target = $region12
      $region11: #{tpu_custom_call.1} parent=5 // pred_region
        %s125 = ssub.s32 %s17, 1
      $region12: #{tpu_custom_call.1} parent=5 // pred_fallthru
        _
      %p126 = scmp.lt.s32.totalorder %s17, 2
      // Predicated region
      $region13: #{tpu_custom_call.1} parent=5 // pred_check
        %p127 = pneg %p126
      $region14: #{tpu_custom_call.1} parent=5 // pred_check_branch
        %129 = sbr.rel (%p127) target = $region16
      $region15: #{tpu_custom_call.1} parent=5 // pred_region
        // Predicated region
        $region17: #{tpu_custom_call.1} parent=15 // pred_check
          %p130 = pneg %p51
        $region18: #{tpu_custom_call.1} parent=15 // pred_check_branch
          %132 = sbr.rel (%p130) target = $region20
        $region19: #{tpu_custom_call.1} parent=15 // pred_region
          %s133 = sand.u32 %s41, 1
          %s134 = scalar_lea.sflag [#allocation3], %s133
          %s135 = sand.u32 %s41, 1
          %s136 = smul.addr %s135, 16
          %s137 = scalar_lea.vmem [#allocation2], %s136
          %s138 = sadd.s32 %s24, %s25
          %s139 = smul.u32 2, %s138
          %141 = vsyncadd %s134, 0
          %s142 = smul.addr %s139, 8
          %s143 = scalar_lea.hbm %s0, %s142
          %s144 = sshll.u32 %s143, 4
          %s145 = int_to_ptr.hbm [resolvable:$true] %s144
          %s146 = sshll.u32 %s137, 4
          %s147 = int_to_ptr.vmem [resolvable:$true] %s146
          %152 = dma.hbm_to_vmem [thread:$0]  %s145, 256, %s147, %s134, 128, 128, 8
        $region20: #{tpu_custom_call.1} parent=15 // pred_fallthru
          _
        // Predicated region
        $region21: #{tpu_custom_call.1} parent=15 // pred_check
          %p153 = pneg %p79
        $region22: #{tpu_custom_call.1} parent=15 // pred_check_branch
          %155 = sbr.rel (%p153) target = $region24
        $region23: #{tpu_custom_call.1} parent=15 // pred_region
          %s156 = sand.u32 %s69, 1
          %s157 = scalar_lea.sflag [#allocation6], %s156
          %s158 = sand.u32 %s69, 1
          %s159 = smul.addr %s158, 8
          %s160 = scalar_lea.vmem [#allocation5], %s159
          %s161 = sadd.s32 %s24, %s25
          %s162 = smul.u32 2, %s161
          %164 = vsyncadd %s157, 0
          %s165 = smul.addr %s162, 4
          %s166 = scalar_lea.hbm %s1, %s165
          %s167 = sshll.u32 %s166, 4
          %s168 = int_to_ptr.hbm [resolvable:$true] %s167
          %s169 = sshll.u32 %s160, 4
          %s170 = int_to_ptr.vmem [resolvable:$true] %s169
          %175 = dma.hbm_to_vmem [thread:$0]  %s168, 128, %s170, %s157, 64, 64, 4
        $region24: #{tpu_custom_call.1} parent=15 // pred_fallthru
          _
      $region16: #{tpu_custom_call.1} parent=5 // pred_fallthru
        _
      %p176 = scmp.le.s32.totalorder 1, %s17
      %p177 = scmp.lt.s32.totalorder %s17, 3
      %p178 = pnand %p176, %p177
      %p179 = pneg %p178
      // Predicated region
      $region25: #{tpu_custom_call.1} parent=5 // pred_check
        _
      $region26: #{tpu_custom_call.1} parent=5 // pred_check_branch
        %181 = sbr.rel (%p178) target = $region28
      $region27: #{tpu_custom_call.1} parent=5 // pred_region
        %s182 = ssub.s32 %s17, 1
        %s183 = sand.u32 %s44, 1
        %s184 = scalar_lea.sflag [#allocation3], %s183
        %s185 = sand.u32 %s44, 1
        %s186 = smul.addr %s185, 16
        %s187 = scalar_lea.vmem [#allocation2], %s186
        // Predicated region
        $region29: #{tpu_custom_call.1} parent=27 // pred_check
          %p188 = pneg %p57
        $region30: #{tpu_custom_call.1} parent=27 // pred_check_branch
          %190 = sbr.rel (%p188) target = $region32
        $region31: #{tpu_custom_call.1} parent=27 // pred_region
          %192 = dma.done %s184, 256
        $region32: #{tpu_custom_call.1} parent=27 // pred_fallthru
          _
        %s193 = sand.u32 %s72, 1
        %s194 = scalar_lea.sflag [#allocation6], %s193
        %s195 = sand.u32 %s72, 1
        %s196 = smul.addr %s195, 8
        %s197 = scalar_lea.vmem [#allocation5], %s196
        // Predicated region
        $region33: #{tpu_custom_call.1} parent=27 // pred_check
          %p198 = pneg %p85
        $region34: #{tpu_custom_call.1} parent=27 // pred_check_branch
          %200 = sbr.rel (%p198) target = $region36
        $region35: #{tpu_custom_call.1} parent=27 // pred_region
          %202 = dma.done %s194, 128
        $region36: #{tpu_custom_call.1} parent=27 // pred_fallthru
          _
        %s203 = sand.u32 %s44, 1
        %s204 = scalar_lea.sflag [#allocation3], %s203
        %s205 = sand.u32 %s44, 1
        %s206 = smul.addr %s205, 16
        %s207 = scalar_lea.vmem [#allocation2], %s206
        %p208 = pneg %p57
        %p209 = pneg %p54
        %s210 = sand.u32 %s72, 1
        %s211 = scalar_lea.sflag [#allocation6], %s210
        %s212 = sand.u32 %s72, 1
        %s213 = smul.addr %s212, 8
        %s214 = scalar_lea.vmem [#allocation5], %s213
        %p215 = pneg %p85
        %p216 = pneg %p82
        %p217 = pneg %p111
        %p218 = pneg %p108
        %s219 = sand.u32 %s98, 1
        %s220 = scalar_lea.sflag [#allocation4], %s219
        %s221 = sand.u32 %s98, 1
        %s222 = smul.addr %s221, 8
        %s223 = scalar_lea.vmem [#allocation7], %s222
        %s224 = sadd.s32 %s26, %s27
        %s225 = smul.u32 2, %s224
        %s226 = sadd.s32 %s26, %s27
        %s227 = smul.u32 2, %s226
        %p228 = scmp.eq.s32.totalorder %s27, 0
        // Predicated region
        $region37: #{tpu_custom_call.1} parent=27 // pred_check
          %p229 = pneg %p228
        $region38: #{tpu_custom_call.1} parent=27 // pred_check_branch
          %231 = sbr.rel (%p229) target = $region40
        $region39: #{tpu_custom_call.1} parent=27 // pred_region
          %232 = vst [vmem:[%s223] sm:$0xff] 0.0
        $region40: #{tpu_custom_call.1} parent=27 // pred_fallthru
          _
        %v233 = vld [vmem:[%s187] sm:$0xff]
        %v234 = vld [vmem:[%s187 + $0x8] sm:$0xff]
        %v235 = vld [vmem:[%s197] sm:$0xf]
        %v236 = vld [vmem:[%s197 + $0x4] sm:$0xf]
        %v237 = vunpack.c.l.bf16 %v235
        %v238 = vunpack.c.l.bf16 %v236
        %v239 = vlog2.pop %v233
        %v240 = vmul.f32 %v239, 0.6931472
        %v241 = vlog2.pop %v234
        %v242 = vmul.f32 %v241, 0.6931472
        %v243 = vmax.f32 %v240, -100.0
        %v244 = vmax.f32 %v242, -100.0
        %v245 = vsub.f32 1.0, %v233
        %v246 = vsub.f32 1.0, %v234
        %v247 = vlog2.pop %v245
        %v248 = vmul.f32 %v247, 0.6931472
        %v249 = vlog2.pop %v246
        %v250 = vmul.f32 %v249, 0.6931472
        %v251 = vmax.f32 %v248, -100.0
        %v252 = vmax.f32 %v250, -100.0
        %v253 = vsub.f32 %v243, %v251
        %v254 = vsub.f32 %v244, %v252
        %v255 = vmul.f32 %v237, %v253
        %v256 = vmul.f32 %v238, %v254
        %v257 = vadd.f32 %v251, %v255
        %v258 = vadd.f32 %v252, %v256
        %v259 = vadd.f32 %v257, %v258
        %v260 = vadd.f32 %v259, 0.0
        %v261 = vld [vmem:[%s223] sm:$0xff]
        %v262 = vadd.f32 %v261, %v260
        %263 = vst [vmem:[%s223] sm:$0xff] %v262
        %s264 = sand.u32 %s98, 1
        %s265 = scalar_lea.sflag [#allocation4], %s264
        %s266 = sand.u32 %s98, 1
        %s267 = smul.addr %s266, 8
        %s268 = scalar_lea.vmem [#allocation7], %s267
        // Predicated region
        $region41: #{tpu_custom_call.1} parent=27 // pred_check
          %p269 = pneg %p108
        $region42: #{tpu_custom_call.1} parent=27 // pred_check_branch
          %271 = sbr.rel (%p269) target = $region44
        $region43: #{tpu_custom_call.1} parent=27 // pred_region
          %273 = vsyncadd %s265, 0
          %s274 = smul.addr %s26, 8
          %s275 = scalar_lea.hbm %s2, %s274
          %s277 = sshll.u32 %s268, 4
          %s278 = int_to_ptr.vmem [resolvable:$true] %s277
          %s279 = sshll.u32 %s275, 4
          %s280 = int_to_ptr.hbm [resolvable:$true] %s279
          %282 = dma.vmem_to_hbm [thread:$0]  %s278, 128, %s280, %s265
        $region44: #{tpu_custom_call.1} parent=27 // pred_fallthru
          _
      $region28: #{tpu_custom_call.1} parent=5 // pred_fallthru
        _
      %p283 = scmp.le.s32.totalorder 2, %s17
      // Predicated region
      $region45: #{tpu_custom_call.1} parent=5 // pred_check
        %p284 = pneg %p283
      $region46: #{tpu_custom_call.1} parent=5 // pred_check_branch
        %286 = sbr.rel (%p284) target = $region48
      $region47: #{tpu_custom_call.1} parent=5 // pred_region
        %s287 = ssub.s32 %s17, 2
        // Predicated region
        $region49: #{tpu_custom_call.1} parent=47 // pred_check
          %p288 = pneg %p114
        $region50: #{tpu_custom_call.1} parent=47 // pred_check_branch
          %290 = sbr.rel (%p288) target = $region52
        $region51: #{tpu_custom_call.1} parent=47 // pred_region
          %s291 = sand.u32 %s99, 1
          %s292 = scalar_lea.sflag [#allocation4], %s291
          %s293 = sand.u32 %s99, 1
          %s294 = smul.addr %s293, 8
          %s295 = scalar_lea.vmem [#allocation7], %s294
          %297 = dma.done %s292, 128
        $region52: #{tpu_custom_call.1} parent=47 // pred_fallthru
          _
      $region48: #{tpu_custom_call.1} parent=5 // pred_fallthru
        _
    $region6: #{tpu_custom_call.1} parent=1 // loop_footer
      %s21 = sadd.s32 1, %s17
    $region7: #{tpu_custom_call.1} parent=1 // loop_footer_branch
      %16 = sbr.rel target = $region3
    $region8: #{tpu_custom_call.1} parent=1 // loop_exit
      _
    %298 = vsyncpa [#allocation3], 1
    %s299 = scalar_lea.sflag [#allocation3], 1
    %300 = vsyncpa %s299, 1
    %301 = vsyncpa [#allocation6], 1
    %s302 = scalar_lea.sflag [#allocation6], 1
    %303 = vsyncpa %s302, 1
    %304 = vsyncpa [#allocation4], 1
    %s305 = scalar_lea.sflag [#allocation4], 1
    %306 = vsyncpa %s305, 1

</llo_original>
